<compile_context>
chip_gen: v7x
topology: tpu7x:2x2x1
jax: 0.10.0
libtpu: 0.0.40
codegen_flags: <defaults>
</compile_context>

<pallas_src>
import functools

import jax
import jax.numpy as jnp
from jax import lax
from jax.experimental import pallas as pl
from jax.experimental.pallas import tpu as pltpu


def _round_up(a, b):
    return (a + b - 1) // b * b


def _vmem_budget_bytes():
    """Generation-aware VMEM budget.

    v5e/v6e (128 MiB physical) -> ~96 MiB; v7x (64 MiB) -> ~40 MiB.
    Falls back to a conservative 40 MiB if the query is unavailable
    (e.g. interpret mode on CPU).
    """
    try:
        cap = int(pltpu.get_tpu_info().vmem_capacity_bytes)
    except Exception:
        cap = 0
    if cap >= 96 * 1024 * 1024:
        return 96 * 1024 * 1024
    if cap > 0:
        return min(40 * 1024 * 1024, cap * 5 // 8)
    return 40 * 1024 * 1024


def _tile_vmem_bytes(tm, d_in, tn, x_item, o_item):
    """Rough per-step VMEM footprint for a (tm, tn) tile (double-buffered)."""
    return (2 * tm * d_in * x_item        # x tile
            + 2 * d_in * tn * 2           # folded W tile (bf16)
            + 2 * tn * 4                  # folded bias tile
            + 2 * tm * tn * o_item        # output tile
            + tm * d_in * 2               # xn scratch (bf16)
            + tm * d_in * 4               # f32 x intermediate (LN pass)
            + 4 * tm * tn * 4)            # f32 y / dropout-hash intermediates


def _pfe_kernel(seed_ref, x_ref, w_ref, b_ref, o_ref, xn_ref,
                *, eps, dropout_p, training):
    j = pl.program_id(1)

    # ---- LayerNorm (no affine: it is folded into W/b), computed once per
    # ---- row tile and cached in bf16 for all output-column tiles.
    @pl.when(j == 0)
    def _():
        x = x_ref[...].astype(jnp.float32)                  # (tm, d_in)
        inv_d = 1.0 / float(x.shape[-1])
        s = jnp.sum(x, axis=-1, keepdims=True)
        sq = jnp.sum(x * x, axis=-1, keepdims=True)
        mean = s * inv_d
        var = jnp.maximum(sq * inv_d - mean * mean, 0.0)
        xn_ref[...] = ((x - mean) * lax.rsqrt(var + eps)).astype(jnp.bfloat16)

    # ---- Linear (LN affine folded in): bf16 MXU inputs, f32 accumulation ----
    y = jnp.dot(xn_ref[...], w_ref[...], preferred_element_type=jnp.float32)
    y = jnp.tanh(y + b_ref[...])                            # (tm, tn)

    # ---- Dropout (training only; identity in eval mode) ---------------------
    if training and dropout_p > 0.0:
        if dropout_p >= 1.0:
            y = jnp.zeros_like(y)
        else:
            # Stateless counter-based hash: one uint32 per output element,
            # keyed on the global (row, col) position and the user seed.
            tm, tn = y.shape
            rows = (lax.broadcasted_iota(jnp.int32, y.shape, 0)
                    + pl.program_id(0) * tm).astype(jnp.uint32)
            cols = (lax.broadcasted_iota(jnp.int32, y.shape, 1)
                    + j * tn).astype(jnp.uint32)
            h = (seed_ref[0].astype(jnp.uint32)
                 ^ (rows * jnp.uint32(0x9E3779B1))
                 ^ (cols * jnp.uint32(0x85EBCA77)))
            h = h ^ (h >> jnp.uint32(16))
            h = h * jnp.uint32(0x7FEB352D)
            h = h ^ (h >> jnp.uint32(15))
            h = h * jnp.uint32(0x846CA68B)
            h = h ^ (h >> jnp.uint32(16))
            threshold = jnp.uint32(min(int(dropout_p * float(2 ** 32)),
                                       2 ** 32 - 1))
            scale = 1.0 / (1.0 - dropout_p)                 # compile-time const
            y = jnp.where(h >= threshold, y * scale, 0.0)

    o_ref[...] = y.astype(o_ref.dtype)


def prepare_params(gamma, beta, w, b, *, resident_bytes=8 * 1024 * 1024):
    """Fold the LayerNorm affine into the Linear layer and lay W out for the
    kernel.  Call once and reuse (hoists the per-call cast/pad work).

    Returns (w_prepped_bf16, b_prepped_f32, d_out, tn).
    """
    w32 = jnp.asarray(w, jnp.float32)
    d_in, d_out = w32.shape
    gamma32 = jnp.asarray(gamma, jnp.float32).reshape(-1)
    beta32 = jnp.asarray(beta, jnp.float32).reshape(-1)
    b32 = jnp.asarray(b, jnp.float32).reshape(-1)

    w_fold = gamma32[:, None] * w32                 # LN scale folded into W
    b_fold = beta32 @ w32 + b32                     # LN shift folded into b

    # Lane-dense output tiling: if the folded bf16 weight is small enough,
    # keep it fully resident (single d_out tile -> W is DMA'd exactly once);
    # otherwise pad to a multiple of 256 and stream 256/512-wide column tiles.
    d_out_128 = _round_up(d_out, 128)
    if d_in * d_out_128 * 2 <= resident_bytes:
        d_out_p, tn = d_out_128, d_out_128
    else:
        d_out_p = _round_up(d_out, 256)
        tn = 512 if (d_out_p % 512 == 0
                     and d_in * 512 * 2 <= 4 * 1024 * 1024) else 256

    w_p = w_fold.astype(jnp.bfloat16)
    b_p = b_fold.reshape(1, -1)
    if d_out_p != d_out:
        w_p = jnp.pad(w_p, ((0, 0), (0, d_out_p - d_out)))
        b_p = jnp.pad(b_p, ((0, 0), (0, d_out_p - d_out)))
    return w_p, b_p, d_out, tn


def private_feature_extractor_prepared(x, w_p, b_p, d_out, tn, *,
                                       eps=1e-5, dropout_p=0.5, training=False,
                                       seed=0, row_tile=512):
    """x: (..., D_in) -> (..., D_out); fused LN + Linear + Tanh (+ Dropout)."""
    orig_shape = x.shape
    d_in, d_out_p = w_p.shape
    assert orig_shape[-1] == d_in, "x feature dim must match weight"
    assert d_out_p % tn == 0

    x2 = x.reshape(-1, d_in)
    n = x2.shape[0]
    x_item = x2.dtype.itemsize
    o_item = jnp.dtype(x.dtype).itemsize

    budget = _vmem_budget_bytes()

    # --- row tiling: largest MXU-friendly tile that fits the VMEM budget ----
    max_rows = _round_up(n, 8)
    cap_tm = max(8, min(int(row_tile), max_rows))
    if (max_rows <= cap_tm
            and _tile_vmem_bytes(max_rows, d_in, tn, x_item, o_item) <= budget):
        tm = max_rows                       # everything in one row tile
    else:
        tm = 8
        cand = 16
        while (cand <= cap_tm
               and _tile_vmem_bytes(cand, d_in, tn, x_item, o_item) <= budget):
            tm = cand
            cand *= 2

    n_p = _round_up(n, tm)
    if n_p != n:
        x2 = jnp.pad(x2, ((0, n_p - n), (0, 0)))

    seed_arr = jnp.asarray([seed], dtype=jnp.int32)
    kernel = functools.partial(_pfe_kernel, eps=float(eps),
                               dropout_p=float(dropout_p),
                               training=bool(training))

    grid = (n_p // tm, d_out_p // tn)

    out = pl.pallas_call(
        kernel,
        out_shape=jax.ShapeDtypeStruct((n_p, d_out_p), x.dtype),
        grid_spec=pltpu.PrefetchScalarGridSpec(
            num_scalar_prefetch=1,
            grid=grid,
            in_specs=[
                pl.BlockSpec((tm, d_in), lambda i, j, s: (i, 0)),   # x rows
                pl.BlockSpec((d_in, tn), lambda i, j, s: (0, j)),   # folded W
                pl.BlockSpec((1, tn), lambda i, j, s: (0, j)),      # folded b
            ],
            out_specs=pl.BlockSpec((tm, tn), lambda i, j, s: (i, j)),
            scratch_shapes=[pltpu.VMEM((tm, d_in), jnp.bfloat16)],  # xn cache
        ),
        compiler_params=pltpu.CompilerParams(
            # i is embarrassingly parallel (megacore); the xn cache persists
            # across the d_out axis, so j must be "arbitrary".
            dimension_semantics=("parallel", "arbitrary"),
            vmem_limit_bytes=int(budget)),
    )(seed_arr, x2, w_p, b_p)

    if n_p != n or d_out_p != d_out:
        out = out[:n, :d_out]
    return out.reshape(orig_shape[:-1] + (d_out,))


def private_feature_extractor(x, gamma, beta, w, b, **kwargs):
    """One-shot convenience wrapper.  For repeated calls, hoist prepare_params."""
    w_p, b_p, d_out, tn = prepare_params(gamma, beta, w, b)
    return private_feature_extractor_prepared(x, w_p, b_p, d_out, tn, **kwargs)


def init_params(key, input_dim, output_dim, dtype=jnp.float32):
    """Parameter init mimicking PyTorch defaults (LN affine slightly perturbed
    here so the affine-folding path is actually exercised)."""
    k_g, k_bt, k_w, k_b = jax.random.split(key, 4)
    gamma = 1.0 + 0.1 * jax.random.normal(k_g, (input_dim,), dtype)
    beta = 0.1 * jax.random.normal(k_bt, (input_dim,), dtype)
    bound = 1.0 / (input_dim ** 0.5)
    # Stored as (D_in, D_out) so the kernel computes x @ W (PyTorch stores W^T).
    w = jax.random.uniform(k_w, (input_dim, output_dim), dtype, -bound, bound)
    b = jax.random.uniform(k_b, (output_dim,), dtype, -bound, bound)
    return gamma, beta, w, b


if __name__ == "__main__":
    key = jax.random.PRNGKey(0)
    k_x, k_p = jax.random.split(key)

    batch, seq, input_dim, output_dim = 2, 8, 32, 32
    x = jax.random.normal(k_x, (batch, seq, input_dim), jnp.float32)
    gamma, beta, w, b = init_params(k_p, input_dim, output_dim)

    # Hoisted parameter prep (LN affine folded into W/b, bf16 cast, padding).
    w_p, b_p, d_out, tn = prepare_params(gamma, beta, w, b)
    w_p, b_p = jax.block_until_ready((w_p, b_p))

    # Eval-mode forward (Dropout is identity, matching module.eval()).
    out = private_feature_extractor_prepared(x, w_p, b_p, d_out, tn,
                                             dropout_p=0.5, training=False)
    out = jax.block_until_ready(out)
    assert out.shape == (batch, seq, output_dim)

    # Pure-JAX f32 reference (kernel GEMM runs bf16 with f32 accumulation,
    # so allow a small tolerance).
    mu = x.mean(-1, keepdims=True)
    var = ((x - mu) ** 2).mean(-1, keepdims=True)
    xn = (x - mu) / jnp.sqrt(var + 1e-5) * gamma + beta
    ref = jnp.tanh(xn @ w + b)
    err = float(jnp.max(jnp.abs(out - ref)))
    assert err < 3e-2, f"max abs err {err}"

    # Training-mode smoke test (dropout active; hash-based mask).
    out_tr = private_feature_extractor_prepared(x, w_p, b_p, d_out, tn,
                                                dropout_p=0.5, training=True,
                                                seed=123)
    out_tr = jax.block_until_ready(out_tr)
    assert out_tr.shape == (batch, seq, output_dim)
    assert bool(jnp.all(jnp.isfinite(out_tr)))
    zero_frac = float(jnp.mean(out_tr == 0.0))
    assert 0.1 < zero_frac < 0.9, f"dropout zero fraction {zero_frac}"

    print("KERNEL_OK")
</pallas_src>

<mosaic_0001>
module attributes {stable_mosaic.version = 11 : i64} {
  func.func @_pfe_kernel(%arg0: i32, %arg1: i32, %arg2: memref<1xi32, #tpu.memory_space<smem>>, %arg3: memref<16x32xf32, #tpu.memory_space<vmem>>, %arg4: memref<32x128xbf16, #tpu.memory_space<vmem>>, %arg5: memref<1x128xf32, #tpu.memory_space<vmem>>, %arg6: memref<16x128xf32, #tpu.memory_space<vmem>>, %arg7: memref<16x32xbf16, #tpu.memory_space<vmem>>) attributes {dimension_semantics = [#tpu.dimension_semantics<parallel>, #tpu.dimension_semantics<arbitrary>], iteration_bounds = array<i64: 1, 1>, scalar_prefetch = 1 : i64, scratch_operands = 1 : i64, tpu.core_type = #tpu.core_type<tc>, window_params = [{transform_indices = @transform_0, window_bounds = array<i64: 16, 32>}, {transform_indices = @transform_1, window_bounds = array<i64: 32, 128>}, {transform_indices = @transform_2, window_bounds = array<i64: 1, 128>}, {transform_indices = @transform_3, window_bounds = array<i64: 16, 128>}]} {
    %c0_i32 = arith.constant 0 : i32
    %0 = arith.cmpi eq, %arg1, %c0_i32 : i32
    %1 = arith.extui %0 : i1 to i32
    %c0_i32_0 = arith.constant 0 : i32
    %2 = arith.cmpi ne, %1, %c0_i32_0 : i32
    scf.if %2 {
      %c0_8 = arith.constant 0 : index
      %c0_9 = arith.constant 0 : index
      %11 = vector.load %arg3[%c0_8, %c0_9] : memref<16x32xf32, #tpu.memory_space<vmem>>, vector<16x32xf32>
      %cst_10 = arith.constant dense<0.000000e+00> : vector<16xf32>
      %12 = vector.multi_reduction <add>, %11, %cst_10 [1] : vector<16x32xf32> to vector<16xf32>
      %13 = vector.shape_cast %12 : vector<16xf32> to vector<16x1xf32>
      %14 = arith.mulf %11, %11 : vector<16x32xf32>
      %cst_11 = arith.constant dense<0.000000e+00> : vector<16xf32>
      %15 = vector.multi_reduction <add>, %14, %cst_11 [1] : vector<16x32xf32> to vector<16xf32>
      %16 = vector.shape_cast %15 : vector<16xf32> to vector<16x1xf32>
      %cst_12 = arith.constant 3.125000e-02 : f32
      %17 = vector.broadcast %cst_12 : f32 to vector<16x1xf32>
      %18 = arith.mulf %13, %17 : vector<16x1xf32>
      %cst_13 = arith.constant 3.125000e-02 : f32
      %19 = vector.broadcast %cst_13 : f32 to vector<16x1xf32>
      %20 = arith.mulf %16, %19 : vector<16x1xf32>
      %21 = arith.mulf %18, %18 : vector<16x1xf32>
      %22 = arith.subf %20, %21 : vector<16x1xf32>
      %cst_14 = arith.constant 0.000000e+00 : f32
      %23 = vector.broadcast %cst_14 : f32 to vector<16x1xf32>
      %24 = arith.maximumf %22, %23 : vector<16x1xf32>
      %25 = vector.broadcast %18 : vector<16x1xf32> to vector<16x32xf32>
      %26 = arith.subf %11, %25 : vector<16x32xf32>
      %cst_15 = arith.constant 9.99999974E-6 : f32
      %27 = vector.broadcast %cst_15 : f32 to vector<16x1xf32>
      %28 = arith.addf %24, %27 : vector<16x1xf32>
      %29 = math.rsqrt %28 : vector<16x1xf32>
      %30 = vector.broadcast %29 : vector<16x1xf32> to vector<16x32xf32>
      %31 = arith.mulf %26, %30 : vector<16x32xf32>
      %32 = arith.truncf %31 : vector<16x32xf32> to vector<16x32xbf16>
      %c0_16 = arith.constant 0 : index
      %c0_17 = arith.constant 0 : index
      %33 = vector.load %arg7[%c0_16, %c0_17] : memref<16x32xbf16, #tpu.memory_space<vmem>>, vector<16x32xbf16>
      tpu.vector_store %arg7[%c0_16, %c0_17], %32 {strides = array<i32>} : memref<16x32xbf16, #tpu.memory_space<vmem>>, vector<16x32xbf16>,
    } else {
    }
    %c0 = arith.constant 0 : index
    %c0_1 = arith.constant 0 : index
    %3 = vector.load %arg7[%c0, %c0_1] : memref<16x32xbf16, #tpu.memory_space<vmem>>, vector<16x32xbf16>
    %c0_2 = arith.constant 0 : index
    %c0_3 = arith.constant 0 : index
    %4 = vector.load %arg4[%c0_2, %c0_3] : memref<32x128xbf16, #tpu.memory_space<vmem>>, vector<32x128xbf16>
    %cst = arith.constant dense<0.000000e+00> : vector<16x128xf32>
    %5 = tpu.matmul %3, %4, %cst {dimension_numbers = #tpu.dot_dimension_numbers<[1], [0], [0], [1], [0, 0, 1, 1], [], []>} : vector<16x32xbf16>, vector<32x128xbf16>, vector<16x128xf32> -> vector<16x128xf32>
    %c0_4 = arith.constant 0 : index
    %c0_5 = arith.constant 0 : index
    %6 = vector.load %arg5[%c0_4, %c0_5] : memref<1x128xf32, #tpu.memory_space<vmem>>, vector<1x128xf32>
    %7 = vector.broadcast %6 : vector<1x128xf32> to vector<16x128xf32>
    %8 = arith.addf %5, %7 : vector<16x128xf32>
    %9 = math.tanh %8 : vector<16x128xf32>
    %c0_6 = arith.constant 0 : index
    %c0_7 = arith.constant 0 : index
    %10 = vector.load %arg6[%c0_6, %c0_7] : memref<16x128xf32, #tpu.memory_space<vmem>>, vector<16x128xf32>
    tpu.vector_store %arg6[%c0_6, %c0_7], %9 {strides = array<i32>} : memref<16x128xf32, #tpu.memory_space<vmem>>, vector<16x128xf32>,
    return
  }
  func.func @transform_0(%arg0: i32, %arg1: i32, %arg2: memref<1xi32, #tpu.memory_space<smem>>) -> (i32, i32) {
    %c0_i32 = arith.constant 0 : i32
    %c0_i32_0 = arith.constant 0 : i32
    return %arg0, %c0_i32 : i32, i32
  }
  func.func @transform_1(%arg0: i32, %arg1: i32, %arg2: memref<1xi32, #tpu.memory_space<smem>>) -> (i32, i32) {
    %c0_i32 = arith.constant 0 : i32
    %c0_i32_0 = arith.constant 0 : i32
    return %c0_i32, %arg1 : i32, i32
  }
  func.func @transform_2(%arg0: i32, %arg1: i32, %arg2: memref<1xi32, #tpu.memory_space<smem>>) -> (i32, i32) {
    %c0_i32 = arith.constant 0 : i32
    %c0_i32_0 = arith.constant 0 : i32
    return %c0_i32, %arg1 : i32, i32
  }
  func.func @transform_3(%arg0: i32, %arg1: i32, %arg2: memref<1xi32, #tpu.memory_space<smem>>) -> (i32, i32) {
    %c0_i32 = arith.constant 0 : i32
    return %arg0, %arg1 : i32, i32
  }
}

</mosaic_0001>

<llo_original>
// kernel: tpu_custom_call.1
$region0: #{tpu_custom_call.1}
  #allocation0 [shape = 'u32[]', space=smem, size = 0x4, offset = 0x4, fixed_abs, tag = 'smem constant byte address 0x4 - core index']
  #allocation1 [shape = 'u32[144,128]{1,0:T(1,128)}', space=vmem, size = 0x12000, scoped, tag = 'internal scratch']
  #allocation2 [shape = 'bf16[16,32]{1,0:T(16,128)(2,1)}', space=vmem, size = 0x1000, scoped, tag = 'scratch operand']
  #allocation3 [shape = 's32[1]{0}', space=sflag, size = 0x4, scoped, tag = 'scoped memory for tpu_custom_call.1']
  #allocation4 [shape = 's32[1]{0:T(128)S(6)}', space=smem, size = 0x200, scoped, tag = 'prefetched SMEM operand 0']
  %s0 = inlined_call_operand.<no memory space> [shape: s32[1], index: 0, kind: input, shape index: {}]
  %s1 = inlined_call_operand.hbm [shape: f32[16,32], index: 1, kind: input, shape index: {}]
  %s2 = inlined_call_operand.hbm [shape: bf16[32,128], index: 2, kind: input, shape index: {}]
  %s3 = inlined_call_operand.vmem [shape: f32[1,128], index: 3, kind: input, shape index: {}]
  %s4 = inlined_call_operand.hbm [shape: f32[16,128], index: 4, kind: output, shape index: {}]
  %s5 = sld [smem:[#allocation0]]
  $region34: #{tpu_custom_call.1} parent=0
    _
  %s7 = ssub.s32 1, %s5
  %s8 = scalar_select 0, %s7, %s5
  %9 = sst [smem:[#allocation4]] %s0
  $region1: #{tpu_custom_call.1} parent=0
    #allocation5 [shape = 'u8[8192]{0}', space=vmem, size = 0x2000, scoped, tag = 'input window, operand 1, single buffered']
    #allocation6 [shape = 's32[1]{0}', space=sflag, size = 0x4, scoped, tag = 'scoped memory for tpu_custom_call.1']
    #allocation7 [shape = 's32[1]{0}', space=sflag, size = 0x4, scoped, tag = 'scoped memory for tpu_custom_call.1']
    #allocation8 [shape = 'u8[8192]{0}', space=vmem, size = 0x2000, scoped, tag = 'input window, operand 2, single buffered']
    #allocation9 [shape = 's32[1]{0}', space=sflag, size = 0x4, scoped, tag = 'scoped memory for tpu_custom_call.1']
    #allocation10 [shape = 'u8[8192]{0}', space=vmem, size = 0x2000, scoped, tag = 'output window, operand 0, single buffered']
    %10 = vsyncpa [#allocation6], 0
    %11 = vsyncpa [#allocation9], 0
    %12 = vsyncpa [#allocation7], 0
    // Predicated region
    $region2: #{tpu_custom_call.1} parent=1 // pred_check
      _
    $region3: #{tpu_custom_call.1} parent=1 // pred_check_branch
      %14 = sbr.rel (0) target = $region5
    $region4: #{tpu_custom_call.1} parent=1 // pred_region
      %s16 = ssub.s32 256, 256
      %17 = vsyncadd [#allocation6], %s16
      %s18 = sshll.u32 [#allocation5], 4
      %s19 = int_to_ptr.vmem [resolvable:$true] %s18
      %24 = dma.hbm_to_vmem [thread:$0]  %s1, 256, %s19, [#allocation6], 128, 128, 8
    $region5: #{tpu_custom_call.1} parent=1 // pred_fallthru
      _
    // Predicated region
    $region6: #{tpu_custom_call.1} parent=1 // pred_check
      _
    $region7: #{tpu_custom_call.1} parent=1 // pred_check_branch
      %26 = sbr.rel (0) target = $region9
    $region8: #{tpu_custom_call.1} parent=1 // pred_region
      %s28 = ssub.s32 256, 256
      %29 = vsyncadd [#allocation9], %s28
      %s30 = sshll.u32 [#allocation8], 4
      %s31 = int_to_ptr.vmem [resolvable:$true] %s30
      %36 = dma.hbm_to_vmem [thread:$0]  %s2, 256, %s31, [#allocation9], 64, 64, 4
    $region9: #{tpu_custom_call.1} parent=1 // pred_fallthru
      _
    // Predicated region
    $region10: #{tpu_custom_call.1} parent=1 // pred_check
      _
    $region11: #{tpu_custom_call.1} parent=1 // pred_check_branch
      %38 = sbr.rel (0) target = $region13
    $region12: #{tpu_custom_call.1} parent=1 // pred_region
      _
    $region13: #{tpu_custom_call.1} parent=1 // pred_fallthru
      _
    // Predicated region
    $region14: #{tpu_custom_call.1} parent=1 // pred_check
      _
    $region15: #{tpu_custom_call.1} parent=1 // pred_check_branch
      %40 = sbr.rel (0) target = $region17
    $region16: #{tpu_custom_call.1} parent=1 // pred_region
      %41 = dma.done [#allocation6], 256
    $region17: #{tpu_custom_call.1} parent=1 // pred_fallthru
      _
    // Predicated region
    $region18: #{tpu_custom_call.1} parent=1 // pred_check
      _
    $region19: #{tpu_custom_call.1} parent=1 // pred_check_branch
      %43 = sbr.rel (0) target = $region21
    $region20: #{tpu_custom_call.1} parent=1 // pred_region
      %44 = dma.done [#allocation9], 256
    $region21: #{tpu_custom_call.1} parent=1 // pred_fallthru
      _
    %p46 = scmp.eq.s32.totalorder 0, 0
    // Predicated region
    $region22: #{tpu_custom_call.1} parent=1 // pred_check
      %p47 = pneg %p46
    $region23: #{tpu_custom_call.1} parent=1 // pred_check_branch
      %49 = sbr.rel (%p47) target = $region25
    $region24: #{tpu_custom_call.1} parent=1 // pred_region
      %v50 = vld [vmem:[#allocation5] sm:$0xff]
      %v51 = vld [vmem:[#allocation5 + $0x8] sm:$0xff]
      %vm52 = vcmask 261120
      %v53 = vsel %vm52, %v50, 0.0
      %54 = vadd.xlane.f32.xlu0 %v53
      %v55 = vpop.xlane.xlu0 %54
      %v56 = vsel %vm52, %v51, 0.0
      %57 = vadd.xlane.f32.xlu0 %v56
      %v58 = vpop.xlane.xlu0 %57
      %v59 = vmul.f32 %v50, %v50
      %v60 = vmul.f32 %v51, %v51
      %v61 = vsel %vm52, %v59, 0.0
      %62 = vadd.xlane.f32.xlu0 %v61
      %v63 = vpop.xlane.xlu0 %62
      %v64 = vsel %vm52, %v60, 0.0
      %65 = vadd.xlane.f32.xlu0 %v64
      %v66 = vpop.xlane.xlu0 %65
      %v67 = vmul.f32 %v55, 0.03125
      %v68 = vmul.f32 %v58, 0.03125
      %v69 = vmul.f32 %v63, 0.03125
      %v70 = vmul.f32 %v66, 0.03125
      %v71 = vmul.f32 %v67, %v67
      %v72 = vmul.f32 %v68, %v68
      %v73 = vsub.f32 %v69, %v71
      %v74 = vsub.f32 %v70, %v72
      %v75 = vmax.f32 %v73, 0.0
      %v76 = vmax.f32 %v74, 0.0
      %v77 = vsub.f32 %v50, %v67
      %v78 = vsub.f32 %v51, %v68
      %v79 = vadd.f32 %v75, 1e-05
      %v80 = vadd.f32 %v76, 1e-05
      %v81 = vrsqrt.pop %v79
      %v82 = vrsqrt.pop %v80
      %v83 = vmul.f32 %v77, %v81
      %v84 = vmul.f32 %v78, %v82
      %v85 = vpack.c.bf16 %v84, %v83
      %86 = vst.msk [vmem:[#allocation2] sm:$0xff] %vm52, %v85
    $region25: #{tpu_custom_call.1} parent=1 // pred_fallthru
      _
    %v87 = vld [vmem:[#allocation2] sm:$0xff]
    %v88 = vld [vmem:[#allocation8] sm:$0xf]
    %v89 = vld [vmem:[#allocation8 + $0x4] sm:$0xf]
    %v90 = vld [vmem:[#allocation8 + $0x8] sm:$0xf]
    %v91 = vld [vmem:[#allocation8 + $0xc] sm:$0xf]
    %v92 = vld [vmem:[%s3] sm:$0x1]
    %v94 = vlaneseq
    %v95 = vshrl.u32 %v94, 7
    %v96 = vsub.s32 0, %v95
    %v97 = vrot.slane %v92, %v96
    %v103 = vunpack.c.l.b16 %v88
    %v104 = vunpack.c.l.b16 %v89
    %v105 = vunpack.c.l.b16 %v90
    %v106 = vunpack.c.l.b16 %v91
    %v107 = vpack.c.b16 %v104, %v103
    %v108 = vpack.c.b16 %v106, %v105
    %vm111 = vcmask 261120
    %v113 = vsel %vm111, %v87, 0
    %115 = vmatprep.subr.bf16.mxu0 0
    %116 = vmatpush1.bf16.msra.mxu0 %v107
    %117 = vmatprep.subr.bf16.mxu0 0
    %118 = vmatpush1.bf16.msra.mxu0 %v108
    %119 = vmatprep.subr.bf16.mxu0 0
    %120 = vmatpush1.bf16.msra.mxu0 0
    %121 = vmatprep.subr.bf16.mxu0 0
    %122 = vmatpush1.bf16.msra.mxu0 0
    %123 = vmatprep.subr.bf16.mxu0 0
    %124 = vmatpush1.bf16.msra.mxu0 0
    %125 = vmatprep.subr.bf16.mxu0 0
    %126 = vmatpush1.bf16.msra.mxu0 0
    %127 = vmatprep.subr.bf16.mxu0 0
    %128 = vmatpush1.bf16.msra.mxu0 0
    %129 = vmatprep.subr.bf16.mxu0 0
    %130 = vmatpush1.bf16.msra.mxu0 0
    %131 = vmatprep.subr.bf16.mxu0 0
    %132 = vmatpush1.bf16.msra.mxu0 0
    %133 = vmatprep.subr.bf16.mxu0 0
    %134 = vmatpush1.bf16.msra.mxu0 0
    %135 = vmatprep.subr.bf16.mxu0 0
    %136 = vmatpush1.bf16.msra.mxu0 0
    %137 = vmatprep.subr.bf16.mxu0 0
    %138 = vmatpush1.bf16.msra.mxu0 0
    %139 = vmatprep.subr.bf16.mxu0 0
    %140 = vmatpush1.bf16.msra.mxu0 0
    %141 = vmatprep.subr.bf16.mxu0 0
    %142 = vmatpush1.bf16.msra.mxu0 0
    %143 = vmatprep.subr.bf16.mxu0 0
    %144 = vmatpush1.bf16.msra.mxu0 0
    %145 = vmatprep.subr.bf16.mxu0 0
    %146 = vmatpush1.bf16.msra.mxu0 0
    %147 = vmatprep.mubr.bf16.mxu0 0
    %148 = vmatmul.mubr.bf16.gmra.mrb[0].mxu0 %v113
    %v149 = vpop.f32.mrb[0].mxu0
    %v150 = vadd.f32 %v97, %v149
    %v151 = vpop.f32.mrb[0].mxu0
    %v152 = vpop.f32.mrb[0].mxu0
    %v153 = vadd.f32 %v97, %v152
    %v154 = vpop.f32.mrb[0].mxu0
    %155 = vdwg.mxu0
    %v156 = vtanh.pop %v150
    %v157 = vtanh.pop %v153
    %158 = vst [vmem:[#allocation10] sm:$0xff] %v156
    %159 = vst [vmem:[#allocation10 + $0x8] sm:$0xff] %v157
    // Predicated region
    $region26: #{tpu_custom_call.1} parent=1 // pred_check
      _
    $region27: #{tpu_custom_call.1} parent=1 // pred_check_branch
      %161 = sbr.rel (0) target = $region29
    $region28: #{tpu_custom_call.1} parent=1 // pred_region
      %s163 = ssub.s32 256, 256
      %164 = vsyncadd [#allocation7], %s163
      %s165 = sshll.u32 [#allocation10], 4
      %s166 = int_to_ptr.vmem [resolvable:$true] %s165
      %171 = dma.vmem_to_hbm [thread:$0]  %s166, 256, %s4, [#allocation7], 128, 128, 8
    $region29: #{tpu_custom_call.1} parent=1 // pred_fallthru
      _
    // Predicated region
    $region30: #{tpu_custom_call.1} parent=1 // pred_check
      _
    $region31: #{tpu_custom_call.1} parent=1 // pred_check_branch
      %173 = sbr.rel (0) target = $region33
    $region32: #{tpu_custom_call.1} parent=1 // pred_region
      %174 = dma.done [#allocation7], 256
    $region33: #{tpu_custom_call.1} parent=1 // pred_fallthru
      _
    %175 = vsyncpa [#allocation6], 1
    %176 = vsyncpa [#allocation9], 1
    %177 = vsyncpa [#allocation7], 1

</llo_original>
